<compile_context>
chip_gen: v5e
topology: v5e:2x2
jax: 0.10.0
libtpu: 0.0.40
codegen_flags: <defaults>
</compile_context>

<pallas_src>
import functools

import jax
import jax.numpy as jnp
from jax.experimental import pallas as pl
from jax.experimental.pallas import tpu as pltpu


def _mlp_kernel(x_ref, w0_ref, w1_ref, w2_ref, w345_ref, b_ref, out_ref):
    """One batch tile: 6 matmuls + 5 sigmoids + log_softmax, fully fused.

    Biases are packed row-wise in b_ref (6, 128), zero padded on the right.
    Only the first matmul uses bf16 MXU operands; everything else is f32.
    No reduction across the batch (sublane) axis, so padded rows of a partial
    last tile stay independent and are masked out on store.
    """
    # Layer 0: image_size -> 128. bf16 operands on the MXU, f32 accumulation.
    x_bf16 = x_ref[...].astype(jnp.bfloat16)                    # (TM, image_size)
    h = jnp.dot(x_bf16, w0_ref[...], preferred_element_type=jnp.float32)
    h = jax.nn.sigmoid(h + b_ref[0:1, 0:128])                   # (TM, 128) f32

    # Layer 1: 128 -> 64, f32 throughout.
    h = jnp.dot(h, w1_ref[...], preferred_element_type=jnp.float32)
    h = jax.nn.sigmoid(h + b_ref[1:2, 0:64])                    # (TM, 64)

    # Layer 2: 64 -> 10.
    h = jnp.dot(h, w2_ref[...], preferred_element_type=jnp.float32)
    h = jax.nn.sigmoid(h + b_ref[2:3, 0:10])                    # (TM, 10)

    # Layers 3, 4: 10 -> 10 + sigmoid.
    for i in range(2):
        h = jnp.dot(h, w345_ref[i], preferred_element_type=jnp.float32)
        h = jax.nn.sigmoid(h + b_ref[3 + i:4 + i, 0:10])

    # Layer 5: 10 -> 10 + log_softmax over dim=1 (per-row; safe with padding).
    z = jnp.dot(h, w345_ref[2], preferred_element_type=jnp.float32)
    z = z + b_ref[5:6, 0:10]                                    # (TM, 10) f32
    m = jnp.max(z, axis=1, keepdims=True)
    lse = jnp.log(jnp.sum(jnp.exp(z - m), axis=1, keepdims=True)) + m
    out_ref[...] = (z - lse).astype(out_ref.dtype)


def init_params(key, image_size):
    """Deterministic init mimicking PyTorch nn.Linear default U(-1/sqrt(fan_in), +)."""
    dims = [(image_size, 128), (128, 64), (64, 10), (10, 10), (10, 10), (10, 10)]
    params = []
    for (fan_in, fan_out) in dims:
        key, kw, kb = jax.random.split(key, 3)
        bound = 1.0 / jnp.sqrt(jnp.float32(fan_in))
        w = jax.random.uniform(kw, (fan_in, fan_out), jnp.float32, -bound, bound)
        b = jax.random.uniform(kb, (fan_out,), jnp.float32, -bound, bound)
        params.append((w, b))
    return params


def pack_params(params):
    """One-time packing (outside jit): fewer operands, weights pre-cast."""
    (w0, b0), (w1, b1), (w2, b2), (w3, b3), (w4, b4), (w5, b5) = params
    b_pack = jnp.zeros((6, 128), jnp.float32)
    for i, b in enumerate((b0, b1, b2, b3, b4, b5)):
        b_pack = b_pack.at[i, : b.shape[-1]].set(b.reshape(-1))
    w345 = jnp.stack([w3, w4, w5]).astype(jnp.float32)          # (3, 10, 10)
    return (w0.astype(jnp.bfloat16),    # only layer 0 uses bf16 MXU operands
            w1.astype(jnp.float32),
            w2.astype(jnp.float32),
            w345,
            b_pack)


def _round_up(v, m):
    return ((v + m - 1) // m) * m


_RESIDENT2 = lambda i: (0, 0)       # weights/biases: same block every step
_RESIDENT3 = lambda i: (0, 0, 0)
_ROW = lambda i: (i, 0)             # activations/output: tiled along batch


@functools.partial(jax.jit, static_argnames=("image_size",))
def model_f_forward(x, packed, image_size):
    w0, w1, w2, w345, b_pack = packed
    # x.view(-1, image_size) equivalent; stays f32 all the way into the kernel.
    x2d = x.reshape(-1, image_size)
    B = x2d.shape[0]

    # Batch tile. Large B: 1024-row tiles (f32 x tile at image_size=784 is
    # ~3.2 MB, ~6.4 MB double-buffered -- fine on every gen incl. v7x 64 MiB).
    # Small B: split into >= 2 tiles (multiple of 8 rows) so v7x's second
    # TensorCore gets work via the "parallel" grid axis.
    TM_MAX = 1024
    if B > TM_MAX:
        TM = TM_MAX
    else:
        TM = max(8, _round_up(pl.cdiv(B, 2), 8))
    grid = (pl.cdiv(B, TM),)

    in_specs = [
        pl.BlockSpec((TM, image_size), _ROW),
        pl.BlockSpec(w0.shape, _RESIDENT2),
        pl.BlockSpec(w1.shape, _RESIDENT2),
        pl.BlockSpec(w2.shape, _RESIDENT2),
        pl.BlockSpec(w345.shape, _RESIDENT3),
        pl.BlockSpec(b_pack.shape, _RESIDENT2),
    ]

    flops = 2 * B * (image_size * 128 + 128 * 64 + 64 * 10 + 3 * 10 * 10)
    transcendentals = B * (128 + 64 + 10 + 10 + 10 + 10 + 1)   # sigmoids + exp + log
    bytes_accessed = (B * image_size * 4 + B * 10 * 4 +        # f32 x in, f32 out
                      w0.size * 2 + w1.size * 4 + w2.size * 4 +
                      w345.size * 4 + b_pack.size * 4)

    out = pl.pallas_call(
        _mlp_kernel,
        out_shape=jax.ShapeDtypeStruct((B, 10), jnp.float32),
        grid=grid,
        in_specs=in_specs,
        out_specs=pl.BlockSpec((TM, 10), _ROW),
        compiler_params=pltpu.CompilerParams(
            dimension_semantics=("parallel",)),
        cost_estimate=pl.CostEstimate(flops=flops,
                                      transcendentals=transcendentals,
                                      bytes_accessed=bytes_accessed),
    )(x2d, w0, w1, w2, w345, b_pack)
    return out


def reference_forward(x, params, image_size):
    """Pure-JAX reference with identical numerics (bf16 only on layer 0)."""
    h = x.reshape(-1, image_size)
    for i, (w, b) in enumerate(params):
        if i == 0:
            z = jnp.dot(h.astype(jnp.bfloat16), w.astype(jnp.bfloat16),
                        preferred_element_type=jnp.float32) + b
        else:
            z = jnp.dot(h, w, preferred_element_type=jnp.float32) + b
        if i < 5:
            h = jax.nn.sigmoid(z)
        else:
            h = jax.nn.log_softmax(z, axis=1)
    return h


if __name__ == "__main__":
    image_size = 64
    key = jax.random.PRNGKey(0)
    key, kx, kx2 = jax.random.split(key, 3)
    params = init_params(key, image_size)
    packed = pack_params(params)

    # Small NCHW input (2, 1, 8, 8) -> view(-1, 64) -> (2, 64).
    x_small = jax.random.normal(kx, (2, 1, 8, 8), jnp.float32)
    out_small = jax.block_until_ready(model_f_forward(x_small, packed, image_size))
    ref_small = reference_forward(x_small, params, image_size)
    assert out_small.shape == (2, 10)
    assert jnp.allclose(out_small, ref_small, atol=1e-4, rtol=1e-4)

    # Larger batch exercises the tiled grid (>= 2 steps, partial last tile).
    x_big = jax.random.normal(kx2, (1000, image_size), jnp.float32)
    out_big = jax.block_until_ready(model_f_forward(x_big, packed, image_size))
    ref_big = reference_forward(x_big, params, image_size)
    assert out_big.shape == (1000, 10)
    assert jnp.allclose(out_big, ref_big, atol=1e-4, rtol=1e-4)

    print("KERNEL_OK")
</pallas_src>

<mosaic_0001>
module attributes {stable_mosaic.version = 11 : i64} {
  func.func @_mlp_kernel(%arg0: i32, %arg1: memref<8x64xf32, #tpu.memory_space<vmem>>, %arg2: memref<64x128xbf16, #tpu.memory_space<vmem>>, %arg3: memref<128x64xf32, #tpu.memory_space<vmem>>, %arg4: memref<64x10xf32, #tpu.memory_space<vmem>>, %arg5: memref<3x10x10xf32, #tpu.memory_space<vmem>>, %arg6: memref<6x128xf32, #tpu.memory_space<vmem>>, %arg7: memref<8x10xf32, #tpu.memory_space<vmem>>) attributes {dimension_semantics = [#tpu.dimension_semantics<parallel>], iteration_bounds = array<i64: 1>, scalar_prefetch = 0 : i64, scratch_operands = 0 : i64, tpu.core_type = #tpu.core_type<tc>, window_params = [{transform_indices = @transform_0, window_bounds = array<i64: 8, 64>}, {pipeline_mode = #tpu.pipeline_mode<synchronous>, transform_indices = @transform_1, window_bounds = array<i64: 64, 128>}, {pipeline_mode = #tpu.pipeline_mode<synchronous>, transform_indices = @transform_2, window_bounds = array<i64: 128, 64>}, {pipeline_mode = #tpu.pipeline_mode<synchronous>, transform_indices = @transform_3, window_bounds = array<i64: 64, 10>}, {pipeline_mode = #tpu.pipeline_mode<synchronous>, transform_indices = @transform_4, window_bounds = array<i64: 3, 10, 10>}, {pipeline_mode = #tpu.pipeline_mode<synchronous>, transform_indices = @transform_5, window_bounds = array<i64: 6, 128>}, {transform_indices = @transform_6, window_bounds = array<i64: 8, 10>}]} {
    %c0 = arith.constant 0 : index
    %c0_0 = arith.constant 0 : index
    %0 = vector.load %arg1[%c0, %c0_0] : memref<8x64xf32, #tpu.memory_space<vmem>>, vector<8x64xf32>
    %1 = arith.truncf %0 : vector<8x64xf32> to vector<8x64xbf16>
    %c0_1 = arith.constant 0 : index
    %c0_2 = arith.constant 0 : index
    %2 = vector.load %arg2[%c0_1, %c0_2] : memref<64x128xbf16, #tpu.memory_space<vmem>>, vector<64x128xbf16>
    %cst = arith.constant dense<0.000000e+00> : vector<8x128xf32>
    %3 = tpu.matmul %1, %2, %cst {dimension_numbers = #tpu.dot_dimension_numbers<[1], [0], [0], [1], [0, 0, 1, 1], [], []>} : vector<8x64xbf16>, vector<64x128xbf16>, vector<8x128xf32> -> vector<8x128xf32>
    %c0_3 = arith.constant 0 : index
    %c0_4 = arith.constant 0 : index
    %4 = vector.load %arg6[%c0_3, %c0_4] : memref<6x128xf32, #tpu.memory_space<vmem>>, vector<1x128xf32>
    %5 = vector.broadcast %4 : vector<1x128xf32> to vector<8x128xf32>
    %6 = arith.addf %3, %5 : vector<8x128xf32>
    %7 = arith.negf %6 : vector<8x128xf32>
    %8 = math.exp %7 : vector<8x128xf32>
    %cst_5 = arith.constant 1.000000e+00 : f32
    %9 = vector.broadcast %cst_5 : f32 to vector<8x128xf32>
    %10 = arith.addf %9, %8 : vector<8x128xf32>
    %11 = arith.divf %9, %10 : vector<8x128xf32>
    %c0_6 = arith.constant 0 : index
    %c0_7 = arith.constant 0 : index
    %12 = vector.load %arg3[%c0_6, %c0_7] : memref<128x64xf32, #tpu.memory_space<vmem>>, vector<128x64xf32>
    %cst_8 = arith.constant dense<0.000000e+00> : vector<8x64xf32>
    %13 = tpu.matmul %11, %12, %cst_8 {dimension_numbers = #tpu.dot_dimension_numbers<[1], [0], [0], [1], [0, 0, 1, 1], [], []>} : vector<8x128xf32>, vector<128x64xf32>, vector<8x64xf32> -> vector<8x64xf32>
    %c1 = arith.constant 1 : index
    %c0_9 = arith.constant 0 : index
    %14 = vector.load %arg6[%c1, %c0_9] : memref<6x128xf32, #tpu.memory_space<vmem>>, vector<1x64xf32>
    %15 = vector.broadcast %14 : vector<1x64xf32> to vector<8x64xf32>
    %16 = arith.addf %13, %15 : vector<8x64xf32>
    %17 = arith.negf %16 : vector<8x64xf32>
    %18 = math.exp %17 : vector<8x64xf32>
    %cst_10 = arith.constant 1.000000e+00 : f32
    %19 = vector.broadcast %cst_10 : f32 to vector<8x64xf32>
    %20 = arith.addf %19, %18 : vector<8x64xf32>
    %21 = arith.divf %19, %20 : vector<8x64xf32>
    %c0_11 = arith.constant 0 : index
    %c0_12 = arith.constant 0 : index
    %22 = vector.load %arg4[%c0_11, %c0_12] : memref<64x10xf32, #tpu.memory_space<vmem>>, vector<64x10xf32>
    %cst_13 = arith.constant dense<0.000000e+00> : vector<8x10xf32>
    %23 = tpu.matmul %21, %22, %cst_13 {dimension_numbers = #tpu.dot_dimension_numbers<[1], [0], [0], [1], [0, 0, 1, 1], [], []>} : vector<8x64xf32>, vector<64x10xf32>, vector<8x10xf32> -> vector<8x10xf32>
    %c2 = arith.constant 2 : index
    %c0_14 = arith.constant 0 : index
    %24 = vector.load %arg6[%c2, %c0_14] : memref<6x128xf32, #tpu.memory_space<vmem>>, vector<1x10xf32>
    %25 = vector.broadcast %24 : vector<1x10xf32> to vector<8x10xf32>
    %26 = arith.addf %23, %25 : vector<8x10xf32>
    %27 = arith.negf %26 : vector<8x10xf32>
    %28 = math.exp %27 : vector<8x10xf32>
    %cst_15 = arith.constant 1.000000e+00 : f32
    %29 = vector.broadcast %cst_15 : f32 to vector<8x10xf32>
    %30 = arith.addf %29, %28 : vector<8x10xf32>
    %31 = arith.divf %29, %30 : vector<8x10xf32>
    %c0_16 = arith.constant 0 : index
    %c0_17 = arith.constant 0 : index
    %c0_18 = arith.constant 0 : index
    %32 = vector.load %arg5[%c0_16, %c0_17, %c0_18] : memref<3x10x10xf32, #tpu.memory_space<vmem>>, vector<1x10x10xf32>
    %33 = vector.shape_cast %32 : vector<1x10x10xf32> to vector<10x10xf32>
    %cst_19 = arith.constant dense<0.000000e+00> : vector<8x10xf32>
    %34 = tpu.matmul %31, %33, %cst_19 {dimension_numbers = #tpu.dot_dimension_numbers<[1], [0], [0], [1], [0, 0, 1, 1], [], []>} : vector<8x10xf32>, vector<10x10xf32>, vector<8x10xf32> -> vector<8x10xf32>
    %c3 = arith.constant 3 : index
    %c0_20 = arith.constant 0 : index
    %35 = vector.load %arg6[%c3, %c0_20] : memref<6x128xf32, #tpu.memory_space<vmem>>, vector<1x10xf32>
    %36 = vector.broadcast %35 : vector<1x10xf32> to vector<8x10xf32>
    %37 = arith.addf %34, %36 : vector<8x10xf32>
    %38 = arith.negf %37 : vector<8x10xf32>
    %39 = math.exp %38 : vector<8x10xf32>
    %cst_21 = arith.constant 1.000000e+00 : f32
    %40 = vector.broadcast %cst_21 : f32 to vector<8x10xf32>
    %41 = arith.addf %40, %39 : vector<8x10xf32>
    %42 = arith.divf %40, %41 : vector<8x10xf32>
    %c1_22 = arith.constant 1 : index
    %c0_23 = arith.constant 0 : index
    %c0_24 = arith.constant 0 : index
    %43 = vector.load %arg5[%c1_22, %c0_23, %c0_24] : memref<3x10x10xf32, #tpu.memory_space<vmem>>, vector<1x10x10xf32>
    %44 = vector.shape_cast %43 : vector<1x10x10xf32> to vector<10x10xf32>
    %cst_25 = arith.constant dense<0.000000e+00> : vector<8x10xf32>
    %45 = tpu.matmul %42, %44, %cst_25 {dimension_numbers = #tpu.dot_dimension_numbers<[1], [0], [0], [1], [0, 0, 1, 1], [], []>} : vector<8x10xf32>, vector<10x10xf32>, vector<8x10xf32> -> vector<8x10xf32>
    %c4 = arith.constant 4 : index
    %c0_26 = arith.constant 0 : index
    %46 = vector.load %arg6[%c4, %c0_26] : memref<6x128xf32, #tpu.memory_space<vmem>>, vector<1x10xf32>
    %47 = vector.broadcast %46 : vector<1x10xf32> to vector<8x10xf32>
    %48 = arith.addf %45, %47 : vector<8x10xf32>
    %49 = arith.negf %48 : vector<8x10xf32>
    %50 = math.exp %49 : vector<8x10xf32>
    %cst_27 = arith.constant 1.000000e+00 : f32
    %51 = vector.broadcast %cst_27 : f32 to vector<8x10xf32>
    %52 = arith.addf %51, %50 : vector<8x10xf32>
    %53 = arith.divf %51, %52 : vector<8x10xf32>
    %c2_28 = arith.constant 2 : index
    %c0_29 = arith.constant 0 : index
    %c0_30 = arith.constant 0 : index
    %54 = vector.load %arg5[%c2_28, %c0_29, %c0_30] : memref<3x10x10xf32, #tpu.memory_space<vmem>>, vector<1x10x10xf32>
    %55 = vector.shape_cast %54 : vector<1x10x10xf32> to vector<10x10xf32>
    %cst_31 = arith.constant dense<0.000000e+00> : vector<8x10xf32>
    %56 = tpu.matmul %53, %55, %cst_31 {dimension_numbers = #tpu.dot_dimension_numbers<[1], [0], [0], [1], [0, 0, 1, 1], [], []>} : vector<8x10xf32>, vector<10x10xf32>, vector<8x10xf32> -> vector<8x10xf32>
    %c5 = arith.constant 5 : index
    %c0_32 = arith.constant 0 : index
    %57 = vector.load %arg6[%c5, %c0_32] : memref<6x128xf32, #tpu.memory_space<vmem>>, vector<1x10xf32>
    %58 = vector.broadcast %57 : vector<1x10xf32> to vector<8x10xf32>
    %59 = arith.addf %56, %58 : vector<8x10xf32>
    %cst_33 = arith.constant dense<0xFF800000> : vector<8xf32>
    %60 = vector.multi_reduction <maximumf>, %59, %cst_33 [1] : vector<8x10xf32> to vector<8xf32>
    %61 = vector.shape_cast %60 : vector<8xf32> to vector<8x1xf32>
    %62 = vector.broadcast %61 : vector<8x1xf32> to vector<8x10xf32>
    %63 = arith.subf %59, %62 : vector<8x10xf32>
    %64 = math.exp %63 : vector<8x10xf32>
    %cst_34 = arith.constant dense<0.000000e+00> : vector<8xf32>
    %65 = vector.multi_reduction <add>, %64, %cst_34 [1] : vector<8x10xf32> to vector<8xf32>
    %66 = vector.shape_cast %65 : vector<8xf32> to vector<8x1xf32>
    %67 = math.log %66 : vector<8x1xf32>
    %68 = arith.addf %67, %61 : vector<8x1xf32>
    %69 = vector.broadcast %68 : vector<8x1xf32> to vector<8x10xf32>
    %70 = arith.subf %59, %69 : vector<8x10xf32>
    %c0_35 = arith.constant 0 : index
    %c0_36 = arith.constant 0 : index
    %71 = vector.load %arg7[%c0_35, %c0_36] : memref<8x10xf32, #tpu.memory_space<vmem>>, vector<8x10xf32>
    tpu.vector_store %arg7[%c0_35, %c0_36], %70 {strides = array<i32>} : memref<8x10xf32, #tpu.memory_space<vmem>>, vector<8x10xf32>,
    return
  }
  func.func @transform_0(%arg0: i32) -> (i32, i32) {
    %c0_i32 = arith.constant 0 : i32
    %c0_i32_0 = arith.constant 0 : i32
    return %arg0, %c0_i32 : i32, i32
  }
  func.func @transform_1(%arg0: i32) -> (i32, i32) {
    %c0_i32 = arith.constant 0 : i32
    %c0_i32_0 = arith.constant 0 : i32
    %c0_i32_1 = arith.constant 0 : i32
    return %c0_i32, %c0_i32_0 : i32, i32
  }
  func.func @transform_2(%arg0: i32) -> (i32, i32) {
    %c0_i32 = arith.constant 0 : i32
    %c0_i32_0 = arith.constant 0 : i32
    %c0_i32_1 = arith.constant 0 : i32
    return %c0_i32, %c0_i32_0 : i32, i32
  }
  func.func @transform_3(%arg0: i32) -> (i32, i32) {
    %c0_i32 = arith.constant 0 : i32
    %c0_i32_0 = arith.constant 0 : i32
    %c0_i32_1 = arith.constant 0 : i32
    return %c0_i32, %c0_i32_0 : i32, i32
  }
  func.func @transform_4(%arg0: i32) -> (i32, i32, i32) {
    %c0_i32 = arith.constant 0 : i32
    %c0_i32_0 = arith.constant 0 : i32
    %c0_i32_1 = arith.constant 0 : i32
    %c0_i32_2 = arith.constant 0 : i32
    return %c0_i32, %c0_i32_0, %c0_i32_1 : i32, i32, i32
  }
  func.func @transform_5(%arg0: i32) -> (i32, i32) {
    %c0_i32 = arith.constant 0 : i32
    %c0_i32_0 = arith.constant 0 : i32
    %c0_i32_1 = arith.constant 0 : i32
    return %c0_i32, %c0_i32_0 : i32, i32
  }
  func.func @transform_6(%arg0: i32) -> (i32, i32) {
    %c0_i32 = arith.constant 0 : i32
    %c0_i32_0 = arith.constant 0 : i32
    return %arg0, %c0_i32 : i32, i32
  }
}

</mosaic_0001>

<llo_original>
// kernel: model_f_forward.1
$region0: #{model_f_forward.1}
  #allocation0 [shape = 'u32[]', space=smem, size = 0x4, offset = 0x4, fixed_abs, tag = 'smem constant byte address 0x4 - core index']
  #allocation1 [shape = 'u32[72,128]{1,0:T(1,128)}', space=vmem, size = 0x9000, scoped, tag = 'internal scratch']
  %s0 = inlined_call_operand.vmem [shape: f32[2,64], index: 0, kind: input, shape index: {}]
  %s1 = inlined_call_operand.vmem [shape: bf16[64,128], index: 1, kind: input, shape index: {}]
  %s2 = inlined_call_operand.vmem [shape: f32[128,64], index: 2, kind: input, shape index: {}]
  %s3 = inlined_call_operand.vmem [shape: f32[64,10], index: 3, kind: input, shape index: {}]
  %s4 = inlined_call_operand.vmem [shape: f32[3,10,10], index: 4, kind: input, shape index: {}]
  %s5 = inlined_call_operand.vmem [shape: f32[6,128], index: 5, kind: input, shape index: {}]
  %s6 = inlined_call_operand.hbm [shape: f32[2,10], index: 6, kind: output, shape index: {}]
  %s7 = sld [smem:[#allocation0]]
  $region34: #{model_f_forward.1} parent=0
    _
  %s9 = ssub.s32 1, %s7
  %s10 = scalar_select 0, %s9, %s7
  $region1: #{model_f_forward.1} parent=0
    #allocation2 [shape = 'u8[4096]{0}', space=vmem, size = 0x1000, scoped, tag = 'output window, operand 0, single buffered']
    #allocation3 [shape = 's32[1]{0}', space=sflag, size = 0x4, scoped, tag = 'scoped memory for model_f_forward.1']
    %11 = vsyncpa [#allocation3], 0
    // Predicated region
    $region2: #{model_f_forward.1} parent=1 // pred_check
      _
    $region3: #{model_f_forward.1} parent=1 // pred_check_branch
      %13 = sbr.rel (0) target = $region5
    $region4: #{model_f_forward.1} parent=1 // pred_region
      _
    $region5: #{model_f_forward.1} parent=1 // pred_fallthru
      _
    // Predicated region
    $region6: #{model_f_forward.1} parent=1 // pred_check
      _
    $region7: #{model_f_forward.1} parent=1 // pred_check_branch
      %15 = sbr.rel (0) target = $region9
    $region8: #{model_f_forward.1} parent=1 // pred_region
      _
    $region9: #{model_f_forward.1} parent=1 // pred_fallthru
      _
    // Predicated region
    $region10: #{model_f_forward.1} parent=1 // pred_check
      _
    $region11: #{model_f_forward.1} parent=1 // pred_check_branch
      %17 = sbr.rel (0) target = $region13
    $region12: #{model_f_forward.1} parent=1 // pred_region
      _
    $region13: #{model_f_forward.1} parent=1 // pred_fallthru
      _
    // Predicated region
    $region14: #{model_f_forward.1} parent=1 // pred_check
      _
    $region15: #{model_f_forward.1} parent=1 // pred_check_branch
      %19 = sbr.rel (0) target = $region17
    $region16: #{model_f_forward.1} parent=1 // pred_region
      _
    $region17: #{model_f_forward.1} parent=1 // pred_fallthru
      _
    // Predicated region
    $region18: #{model_f_forward.1} parent=1 // pred_check
      _
    $region19: #{model_f_forward.1} parent=1 // pred_check_branch
      %21 = sbr.rel (0) target = $region21
    $region20: #{model_f_forward.1} parent=1 // pred_region
      _
    $region21: #{model_f_forward.1} parent=1 // pred_fallthru
      _
    // Predicated region
    $region22: #{model_f_forward.1} parent=1 // pred_check
      _
    $region23: #{model_f_forward.1} parent=1 // pred_check_branch
      %23 = sbr.rel (0) target = $region25
    $region24: #{model_f_forward.1} parent=1 // pred_region
      _
    $region25: #{model_f_forward.1} parent=1 // pred_fallthru
      _
    %v25 = vld [vmem:[%s0] sm:$0xff]
    %v26 = vpack.c.bf16 %v25, %v25
    %v27 = vld [vmem:[%s1] sm:$0xf]
    %v28 = vld [vmem:[%s1 + $0x4] sm:$0xf]
    %v29 = vld [vmem:[%s1 + $0x8] sm:$0xf]
    %v30 = vld [vmem:[%s1 + $0xc] sm:$0xf]
    %v31 = vld [vmem:[%s1 + $0x10] sm:$0xf]
    %v32 = vld [vmem:[%s1 + $0x14] sm:$0xf]
    %v33 = vld [vmem:[%s1 + $0x18] sm:$0xf]
    %v34 = vld [vmem:[%s1 + $0x1c] sm:$0xf]
    %v35 = vld [vmem:[%s5] sm:$0x1]
    %v36 = vperm.slane %v35, 0
    %v45 = vunpack.c.l.b16 %v27
    %v46 = vunpack.c.l.b16 %v28
    %v47 = vunpack.c.l.b16 %v29
    %v48 = vunpack.c.l.b16 %v30
    %v49 = vunpack.c.l.b16 %v31
    %v50 = vunpack.c.l.b16 %v32
    %v51 = vunpack.c.l.b16 %v33
    %v52 = vunpack.c.l.b16 %v34
    %v53 = vpack.c.b16 %v46, %v45
    %v54 = vpack.c.b16 %v48, %v47
    %v55 = vpack.c.b16 %v50, %v49
    %v56 = vpack.c.b16 %v52, %v51
    %vm61 = vcmask 523264
    %v63 = vsel %vm61, %v26, 0
    %65 = vmatpush.bf16.msra.mxu0 0
    %66 = vmatpush.bf16.msra.mxu0 0
    %67 = vmatpush.bf16.msra.mxu0 0
    %68 = vmatpush.bf16.msra.mxu0 0
    %69 = vmatpush.bf16.msra.mxu0 %v56
    %70 = vmatpush.bf16.msra.mxu0 %v55
    %71 = vmatpush.bf16.msra.mxu0 %v54
    %72 = vmatpush.bf16.msra.mxu0 %v53
    %73 = vmatmul.bf16.gmra.mxu0 %v63
    %v74 = vpop.f32.mrf.mxu0
    %v75 = vadd.f32 %v36, %v74
    %v76 = vpop.f32.mrf.mxu0
    %77 = vdwg.mxu0
    %v78 = vxor.u32 %v75, 2147483648
    %v79 = vmul.f32 %v78, 1.442695
    %v80 = vpow.pop %v79
    %v81 = vadd.f32 %v80, 1.0
    %v82 = vrcp.pop %v81
    %v83 = vmul.f32 %v81, %v82
    %v84 = vsub.f32 1.0, %v83
    %v85 = vmul.f32 %v82, %v84
    %v86 = vadd.f32 %v82, %v85
    %vm87 = vweird.f32 %v81
    %vm88 = vweird.f32 %v82
    %vm89 = vmor %vm87, %vm88
    %v90 = vsel %vm89, %v82, %v86
    %v91 = vand.u32 2147483647, %v81
    %vm92 = vcmp.eq.f32.partialorder %v91, 8.507059e+37
    %v93 = vand.u32 %v81, 2147483648
    %v94 = vor.u32 1.1754944e-38, %v93
    %v95 = vsel %vm92, %v94, %v90
    %v96 = vmul.f32 1.0, %v95
    %v97 = vld [vmem:[%s2] sm:$0xff]
    %v98 = vld [vmem:[%s2 + $0x8] sm:$0xff]
    %v99 = vld [vmem:[%s2 + $0x10] sm:$0xff]
    %v100 = vld [vmem:[%s2 + $0x18] sm:$0xff]
    %v101 = vld [vmem:[%s2 + $0x20] sm:$0xff]
    %v102 = vld [vmem:[%s2 + $0x28] sm:$0xff]
    %v103 = vld [vmem:[%s2 + $0x30] sm:$0xff]
    %v104 = vld [vmem:[%s2 + $0x38] sm:$0xff]
    %v105 = vld [vmem:[%s2 + $0x40] sm:$0xff]
    %v106 = vld [vmem:[%s2 + $0x48] sm:$0xff]
    %v107 = vld [vmem:[%s2 + $0x50] sm:$0xff]
    %v108 = vld [vmem:[%s2 + $0x58] sm:$0xff]
    %v109 = vld [vmem:[%s2 + $0x60] sm:$0xff]
    %v110 = vld [vmem:[%s2 + $0x68] sm:$0xff]
    %v111 = vld [vmem:[%s2 + $0x70] sm:$0xff]
    %v112 = vld [vmem:[%s2 + $0x78] sm:$0xff]
    %v113 = vld [vmem:[%s5 + $0x1] sm:$0x1]
    %v114 = vperm.slane %v113, 0
    %115 = vmatpush.msra.mxu0 %v112
    %116 = vmatpush.msra.mxu0 %v111
    %117 = vmatpush.msra.mxu0 %v110
    %118 = vmatpush.msra.mxu0 %v109
    %119 = vmatpush.msra.mxu0 %v108
    %120 = vmatpush.msra.mxu0 %v107
    %121 = vmatpush.msra.mxu0 %v106
    %122 = vmatpush.msra.mxu0 %v105
    %123 = vmatpush.msra.mxu0 %v104
    %124 = vmatpush.msra.mxu0 %v103
    %125 = vmatpush.msra.mxu0 %v102
    %126 = vmatpush.msra.mxu0 %v101
    %127 = vmatpush.msra.mxu0 %v100
    %128 = vmatpush.msra.mxu0 %v99
    %129 = vmatpush.msra.mxu0 %v98
    %130 = vmatpush.msra.mxu0 %v97
    %131 = vmatmul.f32.gmra.mxu0 %v96
    %v132 = vpop.f32.mrf.mxu0
    %v133 = vadd.f32 %v114, %v132
    %134 = vdwg.mxu0
    %v135 = vxor.u32 %v133, 2147483648
    %v136 = vmul.f32 %v135, 1.442695
    %v137 = vpow.pop %v136
    %v138 = vadd.f32 %v137, 1.0
    %v139 = vrcp.pop %v138
    %v140 = vmul.f32 %v138, %v139
    %v141 = vsub.f32 1.0, %v140
    %v142 = vmul.f32 %v139, %v141
    %v143 = vadd.f32 %v139, %v142
    %vm144 = vweird.f32 %v138
    %vm145 = vweird.f32 %v139
    %vm146 = vmor %vm144, %vm145
    %v147 = vsel %vm146, %v139, %v143
    %v148 = vand.u32 2147483647, %v138
    %vm149 = vcmp.eq.f32.partialorder %v148, 8.507059e+37
    %v150 = vand.u32 %v138, 2147483648
    %v151 = vor.u32 1.1754944e-38, %v150
    %v152 = vsel %vm149, %v151, %v147
    %v153 = vmul.f32 1.0, %v152
    %v154 = vld [vmem:[%s3] sm:$0xff]
    %v155 = vld [vmem:[%s3 + $0x8] sm:$0xff]
    %v156 = vld [vmem:[%s3 + $0x10] sm:$0xff]
    %v157 = vld [vmem:[%s3 + $0x18] sm:$0xff]
    %v158 = vld [vmem:[%s3 + $0x20] sm:$0xff]
    %v159 = vld [vmem:[%s3 + $0x28] sm:$0xff]
    %v160 = vld [vmem:[%s3 + $0x30] sm:$0xff]
    %v161 = vld [vmem:[%s3 + $0x38] sm:$0xff]
    %v162 = vld [vmem:[%s5 + $0x2] sm:$0x1]
    %v163 = vperm.slane %v162, 0
    %v165 = vsel %vm61, %v153, 0
    %167 = vmatpush.msra.mxu0 0.0
    %168 = vmatpush.msra.mxu0 0.0
    %169 = vmatpush.msra.mxu0 0.0
    %170 = vmatpush.msra.mxu0 0.0
    %171 = vmatpush.msra.mxu0 0.0
    %172 = vmatpush.msra.mxu0 0.0
    %173 = vmatpush.msra.mxu0 0.0
    %174 = vmatpush.msra.mxu0 0.0
    %175 = vmatpush.msra.mxu0 %v161
    %176 = vmatpush.msra.mxu0 %v160
    %177 = vmatpush.msra.mxu0 %v159
    %178 = vmatpush.msra.mxu0 %v158
    %179 = vmatpush.msra.mxu0 %v157
    %180 = vmatpush.msra.mxu0 %v156
    %181 = vmatpush.msra.mxu0 %v155
    %182 = vmatpush.msra.mxu0 %v154
    %183 = vmatmul.f32.gmra.mxu0 %v165
    %v184 = vpop.f32.mrf.mxu0
    %v185 = vadd.f32 %v163, %v184
    %186 = vdwg.mxu0
    %v187 = vxor.u32 %v185, 2147483648
    %v188 = vmul.f32 %v187, 1.442695
    %v189 = vpow.pop %v188
    %v190 = vadd.f32 %v189, 1.0
    %v191 = vrcp.pop %v190
    %v192 = vmul.f32 %v190, %v191
    %v193 = vsub.f32 1.0, %v192
    %v194 = vmul.f32 %v191, %v193
    %v195 = vadd.f32 %v191, %v194
    %vm196 = vweird.f32 %v190
    %vm197 = vweird.f32 %v191
    %vm198 = vmor %vm196, %vm197
    %v199 = vsel %vm198, %v191, %v195
    %v200 = vand.u32 2147483647, %v190
    %vm201 = vcmp.eq.f32.partialorder %v200, 8.507059e+37
    %v202 = vand.u32 %v190, 2147483648
    %v203 = vor.u32 1.1754944e-38, %v202
    %v204 = vsel %vm201, %v203, %v199
    %v205 = vmul.f32 1.0, %v204
    %v206 = vld [vmem:[%s4] sm:$0xff]
    %v207 = vld [vmem:[%s4 + $0x8] sm:$0x3]
    %v208 = vld [vmem:[%s5 + $0x3] sm:$0x1]
    %v209 = vperm.slane %v208, 0
    %vm210 = vcmask 80896
    %v212 = vsel %vm210, %v205, 0
    %vm214 = vcmask 1041408
    %v216 = vsel %vm214, %v207, 0
    %218 = vmatpush.msra.mxu0 0.0
    %219 = vmatpush.msra.mxu0 0.0
    %220 = vmatpush.msra.mxu0 0.0
    %221 = vmatpush.msra.mxu0 0.0
    %222 = vmatpush.msra.mxu0 0.0
    %223 = vmatpush.msra.mxu0 0.0
    %224 = vmatpush.msra.mxu0 0.0
    %225 = vmatpush.msra.mxu0 0.0
    %226 = vmatpush.msra.mxu0 0.0
    %227 = vmatpush.msra.mxu0 0.0
    %228 = vmatpush.msra.mxu0 0.0
    %229 = vmatpush.msra.mxu0 0.0
    %230 = vmatpush.msra.mxu0 0.0
    %231 = vmatpush.msra.mxu0 0.0
    %232 = vmatpush.msra.mxu0 %v216
    %233 = vmatpush.msra.mxu0 %v206
    %234 = vmatmul.f32.gmra.mxu0 %v212
    %v235 = vpop.f32.mrf.mxu0
    %v236 = vadd.f32 %v209, %v235
    %237 = vdwg.mxu0
    %v238 = vxor.u32 %v236, 2147483648
    %v239 = vmul.f32 %v238, 1.442695
    %v240 = vpow.pop %v239
    %v241 = vadd.f32 %v240, 1.0
    %v242 = vrcp.pop %v241
    %v243 = vmul.f32 %v241, %v242
    %v244 = vsub.f32 1.0, %v243
    %v245 = vmul.f32 %v242, %v244
    %v246 = vadd.f32 %v242, %v245
    %vm247 = vweird.f32 %v241
    %vm248 = vweird.f32 %v242
    %vm249 = vmor %vm247, %vm248
    %v250 = vsel %vm249, %v242, %v246
    %v251 = vand.u32 2147483647, %v241
    %vm252 = vcmp.eq.f32.partialorder %v251, 8.507059e+37
    %v253 = vand.u32 %v241, 2147483648
    %v254 = vor.u32 1.1754944e-38, %v253
    %v255 = vsel %vm252, %v254, %v250
    %v256 = vmul.f32 1.0, %v255
    %s257 = scalar_lea.vmem %s4, 16
    %v258 = vld [vmem:[%s257] sm:$0xff]
    %v259 = vld [vmem:[%s257 + $0x8] sm:$0x3]
    %v260 = vld [vmem:[%s5 + $0x4] sm:$0x1]
    %v261 = vperm.slane %v260, 0
    %v263 = vsel %vm210, %v256, 0
    %v266 = vsel %vm214, %v259, 0
    %268 = vmatpush.msra.mxu0 0.0
    %269 = vmatpush.msra.mxu0 0.0
    %270 = vmatpush.msra.mxu0 0.0
    %271 = vmatpush.msra.mxu0 0.0
    %272 = vmatpush.msra.mxu0 0.0
    %273 = vmatpush.msra.mxu0 0.0
    %274 = vmatpush.msra.mxu0 0.0
    %275 = vmatpush.msra.mxu0 0.0
    %276 = vmatpush.msra.mxu0 0.0
    %277 = vmatpush.msra.mxu0 0.0
    %278 = vmatpush.msra.mxu0 0.0
    %279 = vmatpush.msra.mxu0 0.0
    %280 = vmatpush.msra.mxu0 0.0
    %281 = vmatpush.msra.mxu0 0.0
    %282 = vmatpush.msra.mxu0 %v266
    %283 = vmatpush.msra.mxu0 %v258
    %284 = vmatmul.f32.gmra.mxu0 %v263
    %v285 = vpop.f32.mrf.mxu0
    %v286 = vadd.f32 %v261, %v285
    %287 = vdwg.mxu0
    %v288 = vxor.u32 %v286, 2147483648
    %v289 = vmul.f32 %v288, 1.442695
    %v290 = vpow.pop %v289
    %v291 = vadd.f32 %v290, 1.0
    %v292 = vrcp.pop %v291
    %v293 = vmul.f32 %v291, %v292
    %v294 = vsub.f32 1.0, %v293
    %v295 = vmul.f32 %v292, %v294
    %v296 = vadd.f32 %v292, %v295
    %vm297 = vweird.f32 %v291
    %vm298 = vweird.f32 %v292
    %vm299 = vmor %vm297, %vm298
    %v300 = vsel %vm299, %v292, %v296
    %v301 = vand.u32 2147483647, %v291
    %vm302 = vcmp.eq.f32.partialorder %v301, 8.507059e+37
    %v303 = vand.u32 %v291, 2147483648
    %v304 = vor.u32 1.1754944e-38, %v303
    %v305 = vsel %vm302, %v304, %v300
    %v306 = vmul.f32 1.0, %v305
    %s307 = scalar_lea.vmem %s4, 32
    %v308 = vld [vmem:[%s307] sm:$0xff]
    %v309 = vld [vmem:[%s307 + $0x8] sm:$0x3]
    %v310 = vld [vmem:[%s5 + $0x5] sm:$0x1]
    %v311 = vperm.slane %v310, 0
    %v313 = vsel %vm210, %v306, 0
    %v316 = vsel %vm214, %v309, 0
    %318 = vmatpush.msra.mxu0 0.0
    %319 = vmatpush.msra.mxu0 0.0
    %320 = vmatpush.msra.mxu0 0.0
    %321 = vmatpush.msra.mxu0 0.0
    %322 = vmatpush.msra.mxu0 0.0
    %323 = vmatpush.msra.mxu0 0.0
    %324 = vmatpush.msra.mxu0 0.0
    %325 = vmatpush.msra.mxu0 0.0
    %326 = vmatpush.msra.mxu0 0.0
    %327 = vmatpush.msra.mxu0 0.0
    %328 = vmatpush.msra.mxu0 0.0
    %329 = vmatpush.msra.mxu0 0.0
    %330 = vmatpush.msra.mxu0 0.0
    %331 = vmatpush.msra.mxu0 0.0
    %332 = vmatpush.msra.mxu0 %v316
    %333 = vmatpush.msra.mxu0 %v308
    %334 = vmatmul.f32.gmra.mxu0 %v313
    %v335 = vpop.f32.mrf.mxu0
    %v336 = vadd.f32 %v311, %v335
    %337 = vdwg.mxu0
    %v338 = vsel %vm210, %v336, -inf
    %339 = vmax.xlane.f32.xlu0 %v338
    %v340 = vpop.xlane.xlu0 %339
    %v341 = vsub.f32 %v336, %v340
    %v342 = vmul.f32 %v341, 1.442695
    %v343 = vpow.pop %v342
    %v344 = vsel %vm210, %v343, 0.0
    %345 = vadd.xlane.f32.xlu0 %v344
    %v346 = vpop.xlane.xlu0 %345
    %v347 = vlog2.pop %v346
    %v348 = vmul.f32 %v347, 0.6931472
    %v349 = vadd.f32 %v348, %v340
    %v350 = vsub.f32 %v336, %v349
    %351 = vst.msk [vmem:[#allocation2] sm:$0xff] %vm210, %v350
    // Predicated region
    $region26: #{model_f_forward.1} parent=1 // pred_check
      _
    $region27: #{model_f_forward.1} parent=1 // pred_check_branch
      %353 = sbr.rel (0) target = $region29
    $region28: #{model_f_forward.1} parent=1 // pred_region
      %355 = vsyncadd [#allocation3], 96
      %s356 = sshll.u32 [#allocation2], 4
      %s357 = int_to_ptr.vmem [resolvable:$true] %s356
      %s358 = sshll.u32 %s6, 4
      %s359 = int_to_ptr.hbm [resolvable:$true] %s358
      %364 = dma.vmem_to_hbm [thread:$0]  %s357, 32, %s359, [#allocation3], 32, 32, 2
    $region29: #{model_f_forward.1} parent=1 // pred_fallthru
      _
    // Predicated region
    $region30: #{model_f_forward.1} parent=1 // pred_check
      _
    $region31: #{model_f_forward.1} parent=1 // pred_check_branch
      %366 = sbr.rel (0) target = $region33
    $region32: #{model_f_forward.1} parent=1 // pred_region
      %368 = dma.done [#allocation3], 128
    $region33: #{model_f_forward.1} parent=1 // pred_fallthru
      _
    %369 = vsyncpa [#allocation3], 1

</llo_original>
